<compile_context>
chip_gen: v7x
topology: tpu7x:2x2x1
jax: 0.10.0
libtpu: 0.0.40
codegen_flags: <defaults>
</compile_context>

<pallas_src>
import functools
import math

import jax
import jax.numpy as jnp
from jax import lax
from jax.experimental import pallas as pl
from jax.experimental.pallas import tpu as pltpu


# ---------------------------------------------------------------------------
# Kernel 1: fused causal dilated conv1d + bias + ReLU  (conv + Chomp1d + ReLU)
# ---------------------------------------------------------------------------
def _causal_conv_relu_kernel(x_ref, w_ref, b_ref, o_ref, *, dilation):
    # x_ref: (1, L + (K-1)*dilation, C_in)  left-padded input (one batch row)
    # w_ref: (K, C_in, C_out)               conv taps, pre-transposed
    # b_ref: (1, C_out)
    # o_ref: (1, L, C_out)
    L = o_ref.shape[1]
    K = w_ref.shape[0]
    x = x_ref[0]                                            # (L_pad, C_in)
    acc = jnp.zeros((L, o_ref.shape[2]), jnp.float32)
    for j in range(K):                                      # K is tiny & static
        shift = j * dilation                                # static slice offset
        acc = acc + jnp.dot(x[shift:shift + L, :], w_ref[j],
                            preferred_element_type=jnp.float32)
    acc = acc + b_ref[...]                                  # broadcast (1, C_out)
    o_ref[0] = jnp.maximum(acc, 0.0).astype(o_ref.dtype)


def causal_conv_relu(x_nlc, w_kio, b_1o, dilation):
    """Fused [conv1d(pad=(K-1)*d) -> Chomp1d -> ReLU] in (N, L, C) layout."""
    N, L, C_in = x_nlc.shape
    K, _, C_out = w_kio.shape
    P = (K - 1) * dilation
    # Causal (left-only) padding: chomp is fused away by construction.
    x_pad = jnp.pad(x_nlc, ((0, 0), (P, 0), (0, 0)))
    L_pad = L + P

    kernel = functools.partial(_causal_conv_relu_kernel, dilation=dilation)
    bytes_acc = 4 * (x_pad.size + w_kio.size + b_1o.size + N * L * C_out)
    return pl.pallas_call(
        kernel,
        out_shape=jax.ShapeDtypeStruct((N, L, C_out), x_nlc.dtype),
        grid=(N,),
        in_specs=[
            pl.BlockSpec((1, L_pad, C_in), lambda n: (n, 0, 0)),
            pl.BlockSpec((K, C_in, C_out), lambda n: (0, 0, 0)),  # resident weights
            pl.BlockSpec((1, C_out), lambda n: (0, 0)),
        ],
        out_specs=pl.BlockSpec((1, L, C_out), lambda n: (n, 0, 0)),
        compiler_params=pltpu.CompilerParams(
            dimension_semantics=("parallel",)),            # split batch over TCs (v7x)
        cost_estimate=pl.CostEstimate(
            flops=2 * N * L * C_in * C_out * K,
            transcendentals=0,
            bytes_accessed=bytes_acc),
    )(x_pad, w_kio, b_1o)


# ---------------------------------------------------------------------------
# Kernel 2: SE gating + (optional 1x1 downsample) residual + ReLU, fused
# ---------------------------------------------------------------------------
def _se_residual_kernel(y_ref, r_ref, w1_ref, b1_ref, w2_ref, b2_ref, o_ref):
    y = y_ref[0].astype(jnp.float32)                        # (L, C)
    pooled = jnp.mean(y, axis=0, keepdims=True)             # (1, C) avg pool over L
    h = jnp.maximum(
        jnp.dot(pooled, w1_ref[...], preferred_element_type=jnp.float32)
        + b1_ref[...], 0.0)
    z = jnp.dot(h, w2_ref[...], preferred_element_type=jnp.float32) + b2_ref[...]
    s = 1.0 / (1.0 + jnp.exp(-z))                           # sigmoid gate (1, C)
    out = y * s + r_ref[0].astype(jnp.float32)              # SE scale + residual
    o_ref[0] = jnp.maximum(out, 0.0).astype(o_ref.dtype)


def _se_residual_downsample_kernel(y_ref, x_ref, w1_ref, b1_ref, w2_ref, b2_ref,
                                   wd_ref, bd_ref, o_ref):
    y = y_ref[0].astype(jnp.float32)                        # (L, C)
    pooled = jnp.mean(y, axis=0, keepdims=True)
    h = jnp.maximum(
        jnp.dot(pooled, w1_ref[...], preferred_element_type=jnp.float32)
        + b1_ref[...], 0.0)
    z = jnp.dot(h, w2_ref[...], preferred_element_type=jnp.float32) + b2_ref[...]
    s = 1.0 / (1.0 + jnp.exp(-z))
    # 1x1 downsample conv of the residual, fused in (no extra HBM pass).
    res = jnp.dot(x_ref[0].astype(jnp.float32), wd_ref[...],
                  preferred_element_type=jnp.float32) + bd_ref[...]
    o_ref[0] = jnp.maximum(y * s + res, 0.0).astype(o_ref.dtype)


def se_residual_relu(y_nlc, res_nlc, se_w1, se_b1, se_w2, se_b2, wd=None, bd=None):
    N, L, C = y_nlc.shape
    C_res = res_nlc.shape[2]
    Cr = se_w1.shape[1]

    in_specs = [
        pl.BlockSpec((1, L, C), lambda n: (n, 0, 0)),       # conv output y
        pl.BlockSpec((1, L, C_res), lambda n: (n, 0, 0)),   # residual input
        pl.BlockSpec((C, Cr), lambda n: (0, 0)),            # SE fc1 weight
        pl.BlockSpec((1, Cr), lambda n: (0, 0)),            # SE fc1 bias
        pl.BlockSpec((Cr, C), lambda n: (0, 0)),            # SE fc2 weight
        pl.BlockSpec((1, C), lambda n: (0, 0)),             # SE fc2 bias
    ]
    args = [y_nlc, res_nlc, se_w1, se_b1, se_w2, se_b2]
    if wd is None:
        kernel = _se_residual_kernel
        flops = 2 * N * C * Cr * 2 + 4 * N * L * C
    else:
        kernel = _se_residual_downsample_kernel
        in_specs += [pl.BlockSpec((C_res, C), lambda n: (0, 0)),
                     pl.BlockSpec((1, C), lambda n: (0, 0))]
        args += [wd, bd]
        flops = 2 * N * C * Cr * 2 + 2 * N * L * C_res * C + 4 * N * L * C

    bytes_acc = 4 * (sum(int(a.size) for a in args) + N * L * C)
    return pl.pallas_call(
        kernel,
        out_shape=jax.ShapeDtypeStruct((N, L, C), y_nlc.dtype),
        grid=(N,),
        in_specs=in_specs,
        out_specs=pl.BlockSpec((1, L, C), lambda n: (n, 0, 0)),
        compiler_params=pltpu.CompilerParams(
            dimension_semantics=("parallel",)),
        cost_estimate=pl.CostEstimate(flops=flops, transcendentals=N * C,
                                      bytes_accessed=bytes_acc),
    )(*args)


# ---------------------------------------------------------------------------
# Parameters & forward pass
# ---------------------------------------------------------------------------
def _weight_norm_effective(v):
    # weight_norm (dim=0): W = g * v / ||v||, norm over all dims except dim 0.
    # At initialisation g = ||v||, so the effective weight equals the
    # N(0, 0.01) sample produced by init_weights().
    norm = jnp.sqrt(jnp.sum(v * v, axis=tuple(range(1, v.ndim)), keepdims=True))
    g = norm
    return g * v / norm


def init_temporal_conv_net_params(key, num_inputs, num_channels, kernel_size,
                                  reduction=16):
    params = []
    c_in = num_inputs
    for i, c_out in enumerate(num_channels):
        ks = jax.random.split(jax.random.fold_in(key, i), 10)
        cr = max(c_out // reduction, 1)

        w1 = _weight_norm_effective(
            0.01 * jax.random.normal(ks[0], (c_out, c_in, kernel_size), jnp.float32))
        w2 = _weight_norm_effective(
            0.01 * jax.random.normal(ks[1], (c_out, c_out, kernel_size), jnp.float32))
        b1 = jax.random.uniform(ks[2], (1, c_out), jnp.float32,
                                -1.0 / math.sqrt(c_in * kernel_size),
                                1.0 / math.sqrt(c_in * kernel_size))
        b2 = jax.random.uniform(ks[3], (1, c_out), jnp.float32,
                                -1.0 / math.sqrt(c_out * kernel_size),
                                1.0 / math.sqrt(c_out * kernel_size))
        se_w1 = jax.random.uniform(ks[4], (c_out, cr), jnp.float32,
                                   -1.0 / math.sqrt(c_out), 1.0 / math.sqrt(c_out))
        se_b1 = jax.random.uniform(ks[5], (1, cr), jnp.float32,
                                   -1.0 / math.sqrt(c_out), 1.0 / math.sqrt(c_out))
        se_w2 = jax.random.uniform(ks[6], (cr, c_out), jnp.float32,
                                   -1.0 / math.sqrt(cr), 1.0 / math.sqrt(cr))
        se_b2 = jax.random.uniform(ks[7], (1, c_out), jnp.float32,
                                   -1.0 / math.sqrt(cr), 1.0 / math.sqrt(cr))

        block = {
            # conv weights pre-transposed to (K, C_in, C_out) for (L,Cin)@(Cin,Cout)
            "w1": jnp.transpose(w1, (2, 1, 0)), "b1": b1,
            "w2": jnp.transpose(w2, (2, 1, 0)), "b2": b2,
            "se_w1": se_w1, "se_b1": se_b1, "se_w2": se_w2, "se_b2": se_b2,
        }
        if c_in != c_out:
            wd = 0.01 * jax.random.normal(ks[8], (c_out, c_in, 1), jnp.float32)
            block["wd"] = jnp.transpose(wd[:, :, 0], (1, 0))   # (C_in, C_out)
            block["bd"] = jax.random.uniform(ks[9], (1, c_out), jnp.float32,
                                             -1.0 / math.sqrt(c_in),
                                             1.0 / math.sqrt(c_in))
        params.append(block)
        c_in = c_out
    return params


def temporal_conv_net_senet_forward(x_ncl, params):
    """Forward of TemporalConvNetSENet (inference). x: (N, C, L) PyTorch layout."""
    x = jnp.transpose(x_ncl, (0, 2, 1))  # (N, L, C): channels on lanes
    for i, p in enumerate(params):
        dilation = 2 ** i
        # conv1 -> chomp1 -> relu1 -> dropout1(identity), fused:
        y = causal_conv_relu(x, p["w1"], p["b1"], dilation)
        # conv2 -> chomp2 -> relu2 -> dropout2(identity), fused:
        y = causal_conv_relu(y, p["w2"], p["b2"], dilation)
        # TODO(synk): ScConv is referenced by TemporalBlock but never defined in the
        # spec; treated as identity here. Dropout is identity (inference mode).
        x = se_residual_relu(y, x, p["se_w1"], p["se_b1"], p["se_w2"], p["se_b2"],
                             p.get("wd"), p.get("bd"))
    return jnp.transpose(x, (0, 2, 1))   # back to (N, C, L)


# ---------------------------------------------------------------------------
# Pure-JAX reference (same math, no Pallas) for correctness checking
# ---------------------------------------------------------------------------
def _ref_causal_conv_relu(x_nlc, w_kio, b_1o, dilation):
    N, L, _ = x_nlc.shape
    K = w_kio.shape[0]
    P = (K - 1) * dilation
    xp = jnp.pad(x_nlc, ((0, 0), (P, 0), (0, 0)))
    acc = 0.0
    for j in range(K):
        acc = acc + jnp.einsum("nlc,co->nlo",
                               xp[:, j * dilation:j * dilation + L, :], w_kio[j])
    return jnp.maximum(acc + b_1o[0], 0.0)


def _ref_forward(x_ncl, params):
    x = jnp.transpose(x_ncl, (0, 2, 1))
    for i, p in enumerate(params):
        d = 2 ** i
        y = _ref_causal_conv_relu(x, p["w1"], p["b1"], d)
        y = _ref_causal_conv_relu(y, p["w2"], p["b2"], d)
        pooled = jnp.mean(y, axis=1)                                # (N, C)
        h = jnp.maximum(pooled @ p["se_w1"] + p["se_b1"][0], 0.0)
        s = jax.nn.sigmoid(h @ p["se_w2"] + p["se_b2"][0])
        se = y * s[:, None, :]
        res = x if p.get("wd") is None else (x @ p["wd"] + p["bd"][0])
        x = jnp.maximum(se + res, 0.0)
    return jnp.transpose(x, (0, 2, 1))


if __name__ == "__main__":
    key = jax.random.PRNGKey(0)
    N, num_inputs, L = 2, 4, 16
    num_channels = (32, 32)
    kernel_size = 2

    k_x, k_p = jax.random.split(key)
    x = jax.random.normal(k_x, (N, num_inputs, L), dtype=jnp.float32)
    params = init_temporal_conv_net_params(k_p, num_inputs, num_channels, kernel_size)

    out = temporal_conv_net_senet_forward(x, params)
    out = jax.block_until_ready(out)
    assert out.shape == (N, num_channels[-1], L), out.shape
    assert out.dtype == x.dtype

    # (a) Prove the chomp fusion: fused causal conv  ==  conv1d(pad=P) + Chomp1d + ReLU.
    p0, d0 = params[0], 1
    P0 = (kernel_size - 1) * d0
    w_oik = jnp.transpose(p0["w1"], (2, 1, 0))              # back to (C_out, C_in, K)
    y_full = lax.conv_general_dilated(x, w_oik, window_strides=(1,),
                                      padding=[(P0, P0)], rhs_dilation=(d0,),
                                      dimension_numbers=("NCW", "OIW", "NCW"))
    y_torch_path = jnp.maximum(y_full[:, :, :L] + p0["b1"][0][None, :, None], 0.0)
    y_kernel = jnp.transpose(
        causal_conv_relu(jnp.transpose(x, (0, 2, 1)), p0["w1"], p0["b1"], d0),
        (0, 2, 1))
    assert jnp.allclose(y_kernel, y_torch_path, rtol=1e-2, atol=1e-4), \
        "fused causal conv does not match conv+chomp+relu reference"

    # (b) End-to-end check vs. the pure-JAX reference forward.
    ref = _ref_forward(x, params)
    assert jnp.allclose(out, ref, rtol=1e-2, atol=1e-4), \
        "Pallas TemporalConvNetSENet forward mismatch vs reference"

    print("KERNEL_OK")
</pallas_src>

<mosaic_0001>
module attributes {stable_mosaic.version = 11 : i64} {
  func.func @_causal_conv_relu_kernel(%arg0: i32, %arg1: memref<1x17x4xf32, #tpu.memory_space<vmem>>, %arg2: memref<2x4x32xf32, #tpu.memory_space<vmem>>, %arg3: memref<1x32xf32, #tpu.memory_space<vmem>>, %arg4: memref<1x16x32xf32, #tpu.memory_space<vmem>>) attributes {dimension_semantics = [#tpu.dimension_semantics<parallel>], iteration_bounds = array<i64: 2>, scalar_prefetch = 0 : i64, scratch_operands = 0 : i64, tpu.core_type = #tpu.core_type<tc>, window_params = [{transform_indices = @transform_0, window_bounds = array<i64: 1, 17, 4>}, {pipeline_mode = #tpu.pipeline_mode<synchronous>, transform_indices = @transform_1, window_bounds = array<i64: 2, 4, 32>}, {pipeline_mode = #tpu.pipeline_mode<synchronous>, transform_indices = @transform_2, window_bounds = array<i64: 1, 32>}, {transform_indices = @transform_3, window_bounds = array<i64: 1, 16, 32>}]} {
    %c0 = arith.constant 0 : index
    %c0_0 = arith.constant 0 : index
    %c0_1 = arith.constant 0 : index
    %0 = vector.load %arg1[%c0, %c0_0, %c0_1] : memref<1x17x4xf32, #tpu.memory_space<vmem>>, vector<1x17x4xf32>
    %1 = vector.shape_cast %0 : vector<1x17x4xf32> to vector<17x4xf32>
    %cst = arith.constant 0.000000e+00 : f32
    %2 = vector.broadcast %cst : f32 to vector<16x32xf32>
    %3 = vector.extract_strided_slice %1 {offsets = [0, 0], sizes = [16, 4], strides = [1, 1]} : vector<17x4xf32> to vector<16x4xf32>
    %c0_2 = arith.constant 0 : index
    %c0_3 = arith.constant 0 : index
    %c0_4 = arith.constant 0 : index
    %4 = vector.load %arg2[%c0_2, %c0_3, %c0_4] : memref<2x4x32xf32, #tpu.memory_space<vmem>>, vector<1x4x32xf32>
    %5 = vector.shape_cast %4 : vector<1x4x32xf32> to vector<4x32xf32>
    %cst_5 = arith.constant dense<0.000000e+00> : vector<16x32xf32>
    %6 = tpu.matmul %3, %5, %cst_5 {dimension_numbers = #tpu.dot_dimension_numbers<[1], [0], [0], [1], [0, 0, 1, 1], [], []>} : vector<16x4xf32>, vector<4x32xf32>, vector<16x32xf32> -> vector<16x32xf32>
    %7 = arith.addf %2, %6 : vector<16x32xf32>
    %8 = vector.extract_strided_slice %1 {offsets = [1, 0], sizes = [16, 4], strides = [1, 1]} : vector<17x4xf32> to vector<16x4xf32>
    %c1 = arith.constant 1 : index
    %c0_6 = arith.constant 0 : index
    %c0_7 = arith.constant 0 : index
    %9 = vector.load %arg2[%c1, %c0_6, %c0_7] : memref<2x4x32xf32, #tpu.memory_space<vmem>>, vector<1x4x32xf32>
    %10 = vector.shape_cast %9 : vector<1x4x32xf32> to vector<4x32xf32>
    %cst_8 = arith.constant dense<0.000000e+00> : vector<16x32xf32>
    %11 = tpu.matmul %8, %10, %cst_8 {dimension_numbers = #tpu.dot_dimension_numbers<[1], [0], [0], [1], [0, 0, 1, 1], [], []>} : vector<16x4xf32>, vector<4x32xf32>, vector<16x32xf32> -> vector<16x32xf32>
    %12 = arith.addf %7, %11 : vector<16x32xf32>
    %c0_9 = arith.constant 0 : index
    %c0_10 = arith.constant 0 : index
    %13 = vector.load %arg3[%c0_9, %c0_10] : memref<1x32xf32, #tpu.memory_space<vmem>>, vector<1x32xf32>
    %14 = vector.broadcast %13 : vector<1x32xf32> to vector<16x32xf32>
    %15 = arith.addf %12, %14 : vector<16x32xf32>
    %cst_11 = arith.constant 0.000000e+00 : f32
    %16 = vector.broadcast %cst_11 : f32 to vector<16x32xf32>
    %17 = arith.maximumf %15, %16 : vector<16x32xf32>
    %c0_12 = arith.constant 0 : index
    %c0_13 = arith.constant 0 : index
    %c0_14 = arith.constant 0 : index
    %18 = vector.load %arg4[%c0_12, %c0_13, %c0_14] : memref<1x16x32xf32, #tpu.memory_space<vmem>>, vector<1x16x32xf32>
    %19 = vector.shape_cast %18 : vector<1x16x32xf32> to vector<16x32xf32>
    %20 = vector.shape_cast %17 : vector<16x32xf32> to vector<1x16x32xf32>
    tpu.vector_store %arg4[%c0_12, %c0_13, %c0_14], %20 {strides = array<i32>} : memref<1x16x32xf32, #tpu.memory_space<vmem>>, vector<1x16x32xf32>,
    return
  }
  func.func @transform_0(%arg0: i32) -> (i32, i32, i32) {
    %c0_i32 = arith.constant 0 : i32
    %c0_i32_0 = arith.constant 0 : i32
    %c0_i32_1 = arith.constant 0 : i32
    return %arg0, %c0_i32, %c0_i32_0 : i32, i32, i32
  }
  func.func @transform_1(%arg0: i32) -> (i32, i32, i32) {
    %c0_i32 = arith.constant 0 : i32
    %c0_i32_0 = arith.constant 0 : i32
    %c0_i32_1 = arith.constant 0 : i32
    %c0_i32_2 = arith.constant 0 : i32
    return %c0_i32, %c0_i32_0, %c0_i32_1 : i32, i32, i32
  }
  func.func @transform_2(%arg0: i32) -> (i32, i32) {
    %c0_i32 = arith.constant 0 : i32
    %c0_i32_0 = arith.constant 0 : i32
    %c0_i32_1 = arith.constant 0 : i32
    return %c0_i32, %c0_i32_0 : i32, i32
  }
  func.func @transform_3(%arg0: i32) -> (i32, i32, i32) {
    %c0_i32 = arith.constant 0 : i32
    %c0_i32_0 = arith.constant 0 : i32
    %c0_i32_1 = arith.constant 0 : i32
    return %arg0, %c0_i32, %c0_i32_0 : i32, i32, i32
  }
}

</mosaic_0001>

<llo_original>
// kernel: tpu_custom_call.1
$region0: #{tpu_custom_call.1}
  #allocation0 [shape = 'u32[]', space=smem, size = 0x4, offset = 0x4, fixed_abs, tag = 'smem constant byte address 0x4 - core index']
  #allocation1 [shape = 'u32[144,128]{1,0:T(1,128)}', space=vmem, size = 0x12000, scoped, tag = 'internal scratch']
  %s0 = inlined_call_operand.vmem [shape: f32[2,17,4], index: 0, kind: input, shape index: {}]
  %s1 = inlined_call_operand.vmem [shape: f32[2,4,32], index: 1, kind: input, shape index: {}]
  %s2 = inlined_call_operand.vmem [shape: f32[1,32], index: 2, kind: input, shape index: {}]
  %s3 = inlined_call_operand.hbm [shape: f32[2,16,32], index: 3, kind: output, shape index: {}]
  %s4 = sld [smem:[#allocation0]]
  $region45: #{tpu_custom_call.1} parent=0
    _
  %s6 = ssub.s32 1, %s4
  %s7 = scalar_select 0, %s6, %s4
  $region1: #{tpu_custom_call.1} parent=0
    #allocation2 [shape = 'u8[16384]{0}', space=vmem, size = 0x4000, scoped, tag = 'output window, operand 0']
    #allocation3 [shape = 's32[2]{0}', space=sflag, size = 0x8, scoped, tag = 'scoped memory for tpu_custom_call.1']
    %8 = vsyncpa [#allocation3], 0
    %s9 = scalar_lea.sflag [#allocation3], 1
    %10 = vsyncpa %s9, 0
    loop: start=0, step=1, limit=4
    $region2: #{tpu_custom_call.1} parent=1 // loop_pre_header
      _
    $region3: #{tpu_custom_call.1} parent=1 // loop_header
      %s12 = sphi 0, %s16
      %p13 = scmp.ge.s32.totalorder %s12, 4
      %s22 = sphi 0, %s24
      %s25 = sphi 0, %s22
      %s26 = sphi 0, %s25
      %s42 = sphi 0, %s26
      %s46 = sphi 0, %s46
      %s48 = sphi 0, %s46
      %s49 = sphi 0, %s48
      %s63 = sphi 0, %s49
      %s67 = sphi 0, %s67
      %s69 = sphi 0, %s67
      %s70 = sphi 0, %s69
      %s84 = sphi 0, %s70
      %s90 = sphi 0, %s92
      %s93 = sphi 0, %s90
      %s94 = sphi 0, %s93
      %s110 = sphi 0, %s94
    $region4: #{tpu_custom_call.1} parent=1 // loop_header_branch
      %15 = sbr.rel (%p13) target = $region8
    $region5: #{tpu_custom_call.1} parent=1 // loop_body
      %s17 = ssub.s32 %s12, 1
      %s18 = ssub.s32 %s12, 2
      %s19 = sadd.s32 %s12, 1
      %s20 = ssub.s32 %s12, %s19
      %p21 = scmp.eq.s32.totalorder %s20, 0
      %s23 = sadd.s32 %s22, 1
      %s24 = scalar_select %p21, %s22, %s23
      %p27 = pneg %p21
      %p28 = scmp.eq.s32.totalorder %s12, 1
      %p29 = por %p27, %p28
      %p30 = scmp.ne.s32.totalorder %s22, %s25
      %p31 = scmp.eq.s32.totalorder %s12, 0
      %p32 = por %p30, %p31
      %p33 = scmp.ne.s32.totalorder %s22, %s25
      %p34 = scmp.eq.s32.totalorder %s17, 1
      %p35 = por %p33, %p34
      %p36 = scmp.ne.s32.totalorder %s25, %s26
      %p37 = scmp.eq.s32.totalorder %s17, 0
      %p38 = por %p36, %p37
      %p39 = scmp.ne.s32.totalorder %s25, %s26
      %p40 = scmp.eq.s32.totalorder %s18, 1
      %p41 = por %p39, %p40
      %p43 = scmp.ne.s32.totalorder %s26, %s42
      %p44 = scmp.eq.s32.totalorder %s18, 0
      %p45 = por %p43, %p44
      %s47 = sadd.s32 %s46, 1
      %p50 = scmp.eq.s32.totalorder %s12, 1
      %p51 = scmp.ne.s32.totalorder %s46, %s48
      %p52 = scmp.eq.s32.totalorder %s12, 0
      %p53 = por %p51, %p52
      %p54 = scmp.ne.s32.totalorder %s46, %s48
      %p55 = scmp.eq.s32.totalorder %s17, 1
      %p56 = por %p54, %p55
      %p57 = scmp.ne.s32.totalorder %s48, %s49
      %p58 = scmp.eq.s32.totalorder %s17, 0
      %p59 = por %p57, %p58
      %p60 = scmp.ne.s32.totalorder %s48, %s49
      %p61 = scmp.eq.s32.totalorder %s18, 1
      %p62 = por %p60, %p61
      %p64 = scmp.ne.s32.totalorder %s49, %s63
      %p65 = scmp.eq.s32.totalorder %s18, 0
      %p66 = por %p64, %p65
      %s68 = sadd.s32 %s67, 1
      %p71 = scmp.eq.s32.totalorder %s12, 1
      %p72 = scmp.ne.s32.totalorder %s67, %s69
      %p73 = scmp.eq.s32.totalorder %s12, 0
      %p74 = por %p72, %p73
      %p75 = scmp.ne.s32.totalorder %s67, %s69
      %p76 = scmp.eq.s32.totalorder %s17, 1
      %p77 = por %p75, %p76
      %p78 = scmp.ne.s32.totalorder %s69, %s70
      %p79 = scmp.eq.s32.totalorder %s17, 0
      %p80 = por %p78, %p79
      %p81 = scmp.ne.s32.totalorder %s69, %s70
      %p82 = scmp.eq.s32.totalorder %s18, 1
      %p83 = por %p81, %p82
      %p85 = scmp.ne.s32.totalorder %s70, %s84
      %p86 = scmp.eq.s32.totalorder %s18, 0
      %p87 = por %p85, %p86
      %s88 = ssub.s32 %s12, %s19
      %p89 = scmp.eq.s32.totalorder %s88, 0
      %s91 = sadd.s32 %s90, 1
      %s92 = scalar_select %p89, %s90, %s91
      %p95 = pneg %p89
      %p96 = scmp.eq.s32.totalorder %s12, 1
      %p97 = por %p95, %p96
      %p98 = scmp.ne.s32.totalorder %s90, %s93
      %p99 = scmp.eq.s32.totalorder %s12, 0
      %p100 = por %p98, %p99
      %p101 = scmp.ne.s32.totalorder %s90, %s93
      %p102 = scmp.eq.s32.totalorder %s17, 1
      %p103 = por %p101, %p102
      %p104 = scmp.ne.s32.totalorder %s93, %s94
      %p105 = scmp.eq.s32.totalorder %s17, 0
      %p106 = por %p104, %p105
      %p107 = scmp.ne.s32.totalorder %s93, %s94
      %p108 = scmp.eq.s32.totalorder %s18, 1
      %p109 = por %p107, %p108
      %p111 = scmp.ne.s32.totalorder %s94, %s110
      %p112 = scmp.eq.s32.totalorder %s18, 0
      %p113 = por %p111, %p112
      %p114 = scmp.le.s32.totalorder 1, %s12
      %p115 = scmp.lt.s32.totalorder %s12, 3
      %p116 = pnand %p114, %p115
      %p117 = pneg %p116
      // Predicated region
      $region9: #{tpu_custom_call.1} parent=5 // pred_check
        _
      $region10: #{tpu_custom_call.1} parent=5 // pred_check_branch
        %119 = sbr.rel (%p116) target = $region12
      $region11: #{tpu_custom_call.1} parent=5 // pred_region
        %s120 = ssub.s32 %s12, 1
        // Predicated region
        $region13: #{tpu_custom_call.1} parent=11 // pred_check
          %p121 = pneg %p59
        $region14: #{tpu_custom_call.1} parent=11 // pred_check_branch
          %123 = sbr.rel (%p121) target = $region16
        $region15: #{tpu_custom_call.1} parent=11 // pred_region
          _
        $region16: #{tpu_custom_call.1} parent=11 // pred_fallthru
          _
        // Predicated region
        $region17: #{tpu_custom_call.1} parent=11 // pred_check
          %p124 = pneg %p80
        $region18: #{tpu_custom_call.1} parent=11 // pred_check_branch
          %126 = sbr.rel (%p124) target = $region20
        $region19: #{tpu_custom_call.1} parent=11 // pred_region
          _
        $region20: #{tpu_custom_call.1} parent=11 // pred_fallthru
          _
      $region12: #{tpu_custom_call.1} parent=5 // pred_fallthru
        _
      %p127 = scmp.lt.s32.totalorder %s12, 2
      // Predicated region
      $region21: #{tpu_custom_call.1} parent=5 // pred_check
        %p128 = pneg %p127
      $region22: #{tpu_custom_call.1} parent=5 // pred_check_branch
        %130 = sbr.rel (%p128) target = $region24
      $region23: #{tpu_custom_call.1} parent=5 // pred_region
        // Predicated region
        $region25: #{tpu_custom_call.1} parent=23 // pred_check
          %p131 = pneg %p32
        $region26: #{tpu_custom_call.1} parent=23 // pred_check_branch
          %133 = sbr.rel (%p131) target = $region28
        $region27: #{tpu_custom_call.1} parent=23 // pred_region
          %p134 = scmp.lt.s32.totalorder %s12, 1
          %s135 = scalar_select %p134, %s12, 1
          %s136 = smul.addr %s135, 3
          %s137 = smul.addr %s136, 8
          %s138 = scalar_lea.vmem %s0, %s137
        $region28: #{tpu_custom_call.1} parent=23 // pred_fallthru
          _
      $region24: #{tpu_custom_call.1} parent=5 // pred_fallthru
        _
      %p139 = scmp.le.s32.totalorder 1, %s12
      %p140 = scmp.lt.s32.totalorder %s12, 3
      %p141 = pnand %p139, %p140
      %p142 = pneg %p141
      // Predicated region
      $region29: #{tpu_custom_call.1} parent=5 // pred_check
        _
      $region30: #{tpu_custom_call.1} parent=5 // pred_check_branch
        %144 = sbr.rel (%p141) target = $region32
      $region31: #{tpu_custom_call.1} parent=5 // pred_region
        %s145 = ssub.s32 %s12, 1
        %p146 = scmp.lt.s32.totalorder %s17, 1
        %s147 = scalar_select %p146, %s17, 1
        %s148 = smul.addr %s147, 3
        %s149 = smul.addr %s148, 8
        %s150 = scalar_lea.vmem %s0, %s149
        %p151 = pneg %p38
        %p152 = pneg %p35
        %p153 = pneg %p59
        %p154 = pneg %p56
        %p155 = pneg %p80
        %p156 = pneg %p77
        %p157 = pneg %p106
        %p158 = pneg %p103
        %s159 = sand.u32 %s93, 1
        %s160 = scalar_lea.sflag [#allocation3], %s159
        %s161 = sand.u32 %s93, 1
        %s162 = smul.addr %s161, 16
        %s163 = scalar_lea.vmem [#allocation2], %s162
        %p164 = scmp.lt.s32.totalorder %s17, 1
        %s165 = scalar_select %p164, %s17, 1
        %s166 = smul.addr %s165, 3
        %s167 = smul.addr %s166, 8
        %s168 = scalar_lea.vmem %s0, %s167
        %v169 = vld [vmem:[%s168] sm:$0xff]
        %v170 = vld [vmem:[%s168 + $0x8] sm:$0xff]
        %v171 = vld [vmem:[%s168 + $0x10] sm:$0x1]
        %v172 = vld [vmem:[%s1] sm:$0xf]
        %s173 = scalar_lea.vmem %s1, 4
        %v174 = vld [vmem:[%s173] sm:$0xf]
        %vm178 = vcmask 1046528
        %v179 = vrot.slane %v169, 1
        %v180 = vrot.slane %v170, 1
        %v181 = vsel %vm178, %v179, %v180
        %v182 = vrot.slane %v171, 1
        %v183 = vsel %vm178, %v180, %v182
        %vm184 = vcmask 31744
        %v185 = vsel %vm184, %v181, 0
        %v187 = vsel %vm184, %v183, 0
        %vm189 = vcmask 1043456
        %v191 = vsel %vm189, %v174, 0
        %193 = vmatprep.subr.mxu0 0.0
        %194 = vmatpush1.msra.mxu0 %v191
        %195 = vmatprep.subr.mxu0 0.0
        %196 = vmatpush1.msra.mxu0 0.0
        %197 = vmatprep.subr.mxu0 0.0
        %198 = vmatpush1.msra.mxu0 0.0
        %199 = vmatprep.subr.mxu0 0.0
        %200 = vmatpush1.msra.mxu0 0.0
        %201 = vmatprep.subr.mxu0 0.0
        %202 = vmatpush1.msra.mxu0 0.0
        %203 = vmatprep.subr.mxu0 0.0
        %204 = vmatpush1.msra.mxu0 0.0
        %205 = vmatprep.subr.mxu0 0.0
        %206 = vmatpush1.msra.mxu0 0.0
        %207 = vmatprep.subr.mxu0 0.0
        %208 = vmatpush1.msra.mxu0 0.0
        %209 = vmatprep.subr.mxu0 0.0
        %210 = vmatpush1.msra.mxu0 0.0
        %211 = vmatprep.subr.mxu0 0.0
        %212 = vmatpush1.msra.mxu0 0.0
        %213 = vmatprep.subr.mxu0 0.0
        %214 = vmatpush1.msra.mxu0 0.0
        %215 = vmatprep.subr.mxu0 0.0
        %216 = vmatpush1.msra.mxu0 0.0
        %217 = vmatprep.subr.mxu0 0.0
        %218 = vmatpush1.msra.mxu0 0.0
        %219 = vmatprep.subr.mxu0 0.0
        %220 = vmatpush1.msra.mxu0 0.0
        %221 = vmatprep.subr.mxu0 0.0
        %222 = vmatpush1.msra.mxu0 0.0
        %223 = vmatprep.subr.mxu0 0.0
        %224 = vmatpush1.msra.mxu0 0.0
        %225 = vmatprep.subr.mxu0 0.0
        %226 = vmatpush1.msra.mxu0 0.0
        %227 = vmatprep.subr.mxu0 0.0
        %228 = vmatpush1.msra.mxu0 0.0
        %229 = vmatprep.subr.mxu0 0.0
        %230 = vmatpush1.msra.mxu0 0.0
        %231 = vmatprep.subr.mxu0 0.0
        %232 = vmatpush1.msra.mxu0 0.0
        %233 = vmatprep.subr.mxu0 0.0
        %234 = vmatpush1.msra.mxu0 0.0
        %235 = vmatprep.subr.mxu0 0.0
        %236 = vmatpush1.msra.mxu0 0.0
        %237 = vmatprep.subr.mxu0 0.0
        %238 = vmatpush1.msra.mxu0 0.0
        %239 = vmatprep.subr.mxu0 0.0
        %240 = vmatpush1.msra.mxu0 0.0
        %241 = vmatprep.subr.mxu0 0.0
        %242 = vmatpush1.msra.mxu0 0.0
        %243 = vmatprep.subr.mxu0 0.0
        %244 = vmatpush1.msra.mxu0 0.0
        %245 = vmatprep.subr.mxu0 0.0
        %246 = vmatpush1.msra.mxu0 0.0
        %247 = vmatprep.subr.mxu0 0.0
        %248 = vmatpush1.msra.mxu0 0.0
        %249 = vmatprep.subr.mxu0 0.0
        %250 = vmatpush1.msra.mxu0 0.0
        %251 = vmatprep.subr.mxu0 0.0
        %252 = vmatpush1.msra.mxu0 0.0
        %253 = vmatprep.subr.mxu0 0.0
        %254 = vmatpush1.msra.mxu0 0.0
        %255 = vmatprep.subr.mxu0 0.0
        %256 = vmatpush1.msra.mxu0 0.0
        %257 = vmatprep.mubr.f32.mxu0 0.0
        %258 = vmatmul.mubr.f32.gmra.mrb[0].mxu0 %v185
        %v259 = vpop.f32.mrb[0].mxu0
        %v260 = vadd.f32 0.0, %v259
        %v261 = vpop.f32.mrb[0].mxu0
        %262 = vmatprep.mubr.f32.mxu0 0.0
        %263 = vmatmul.mubr.f32.gmra.mrb[0].mxu0 %v187
        %v264 = vpop.f32.mrb[0].mxu0
        %v265 = vadd.f32 0.0, %v264
        %v266 = vpop.f32.mrb[0].mxu0
        %267 = vdwg.mxu0
        %v268 = vsel %vm184, %v169, 0
        %v270 = vsel %vm184, %v170, 0
        %v273 = vsel %vm189, %v172, 0
        %275 = vmatprep.subr.mxu0 0.0
        %276 = vmatpush1.msra.mxu0 %v273
        %277 = vmatprep.subr.mxu0 0.0
        %278 = vmatpush1.msra.mxu0 0.0
        %279 = vmatprep.subr.mxu0 0.0
        %280 = vmatpush1.msra.mxu0 0.0
        %281 = vmatprep.subr.mxu0 0.0
        %282 = vmatpush1.msra.mxu0 0.0
        %283 = vmatprep.subr.mxu0 0.0
        %284 = vmatpush1.msra.mxu0 0.0
        %285 = vmatprep.subr.mxu0 0.0
        %286 = vmatpush1.msra.mxu0 0.0
        %287 = vmatprep.subr.mxu0 0.0
        %288 = vmatpush1.msra.mxu0 0.0
        %289 = vmatprep.subr.mxu0 0.0
        %290 = vmatpush1.msra.mxu0 0.0
        %291 = vmatprep.subr.mxu0 0.0
        %292 = vmatpush1.msra.mxu0 0.0
        %293 = vmatprep.subr.mxu0 0.0
        %294 = vmatpush1.msra.mxu0 0.0
        %295 = vmatprep.subr.mxu0 0.0
        %296 = vmatpush1.msra.mxu0 0.0
        %297 = vmatprep.subr.mxu0 0.0
        %298 = vmatpush1.msra.mxu0 0.0
        %299 = vmatprep.subr.mxu0 0.0
        %300 = vmatpush1.msra.mxu0 0.0
        %301 = vmatprep.subr.mxu0 0.0
        %302 = vmatpush1.msra.mxu0 0.0
        %303 = vmatprep.subr.mxu0 0.0
        %304 = vmatpush1.msra.mxu0 0.0
        %305 = vmatprep.subr.mxu0 0.0
        %306 = vmatpush1.msra.mxu0 0.0
        %307 = vmatprep.subr.mxu0 0.0
        %308 = vmatpush1.msra.mxu0 0.0
        %309 = vmatprep.subr.mxu0 0.0
        %310 = vmatpush1.msra.mxu0 0.0
        %311 = vmatprep.subr.mxu0 0.0
        %312 = vmatpush1.msra.mxu0 0.0
        %313 = vmatprep.subr.mxu0 0.0
        %314 = vmatpush1.msra.mxu0 0.0
        %315 = vmatprep.subr.mxu0 0.0
        %316 = vmatpush1.msra.mxu0 0.0
        %317 = vmatprep.subr.mxu0 0.0
        %318 = vmatpush1.msra.mxu0 0.0
        %319 = vmatprep.subr.mxu0 0.0
        %320 = vmatpush1.msra.mxu0 0.0
        %321 = vmatprep.subr.mxu0 0.0
        %322 = vmatpush1.msra.mxu0 0.0
        %323 = vmatprep.subr.mxu0 0.0
        %324 = vmatpush1.msra.mxu0 0.0
        %325 = vmatprep.subr.mxu0 0.0
        %326 = vmatpush1.msra.mxu0 0.0
        %327 = vmatprep.subr.mxu0 0.0
        %328 = vmatpush1.msra.mxu0 0.0
        %329 = vmatprep.subr.mxu0 0.0
        %330 = vmatpush1.msra.mxu0 0.0
        %331 = vmatprep.subr.mxu0 0.0
        %332 = vmatpush1.msra.mxu0 0.0
        %333 = vmatprep.subr.mxu0 0.0
        %334 = vmatpush1.msra.mxu0 0.0
        %335 = vmatprep.subr.mxu0 0.0
        %336 = vmatpush1.msra.mxu0 0.0
        %337 = vmatprep.subr.mxu0 0.0
        %338 = vmatpush1.msra.mxu0 0.0
        %339 = vmatprep.mubr.f32.mxu0 0.0
        %340 = vmatmul.mubr.f32.gmra.mrb[0].mxu0 %v268
        %v341 = vpop.f32.mrb[0].mxu0
        %v342 = vadd.f32 %v260, %v341
        %v343 = vpop.f32.mrb[0].mxu0
        %344 = vmatprep.mubr.f32.mxu0 0.0
        %345 = vmatmul.mubr.f32.gmra.mrb[0].mxu0 %v270
        %v346 = vpop.f32.mrb[0].mxu0
        %v347 = vadd.f32 %v265, %v346
        %v348 = vpop.f32.mrb[0].mxu0
        %349 = vdwg.mxu0
        %v350 = vld [vmem:[%s2] sm:$0x1]
        %v352 = vlaneseq
        %v353 = vshrl.u32 %v352, 7
        %v354 = vsub.s32 0, %v353
        %v355 = vrot.slane %v350, %v354
        %v357 = vadd.f32 %v342, %v355
        %v358 = vadd.f32 %v347, %v355
        %v359 = vmax.f32 %v357, 0.0
        %v360 = vmax.f32 %v358, 0.0
        %vm361 = vcmask 261120
        %362 = vst.msk [vmem:[%s163] sm:$0xff] %vm361, %v359
        %363 = vst.msk [vmem:[%s163 + $0x8] sm:$0xff] %vm361, %v360
        %s364 = sand.u32 %s93, 1
        %s365 = scalar_lea.sflag [#allocation3], %s364
        %s366 = sand.u32 %s93, 1
        %s367 = smul.addr %s366, 16
        %s368 = scalar_lea.vmem [#allocation2], %s367
        // Predicated region
        $region33: #{tpu_custom_call.1} parent=31 // pred_check
          %p369 = pneg %p103
        $region34: #{tpu_custom_call.1} parent=31 // pred_check_branch
          %371 = sbr.rel (%p369) target = $region36
        $region35: #{tpu_custom_call.1} parent=31 // pred_region
          %s373 = ssub.s32 256, 256
          %374 = vsyncadd %s365, %s373
          %s375 = smul.addr %s17, 2
          %s376 = smul.addr %s375, 128
          %s377 = scalar_lea.hbm %s3, %s376
          %s378 = sshll.u32 %s368, 4
          %s379 = int_to_ptr.vmem [resolvable:$true] %s378
          %384 = dma.vmem_to_hbm [thread:$0]  %s379, 256, %s377, %s365, 128, 128, 8
        $region36: #{tpu_custom_call.1} parent=31 // pred_fallthru
          _
      $region32: #{tpu_custom_call.1} parent=5 // pred_fallthru
        _
      %p385 = scmp.le.s32.totalorder 2, %s12
      // Predicated region
      $region37: #{tpu_custom_call.1} parent=5 // pred_check
        %p386 = pneg %p385
      $region38: #{tpu_custom_call.1} parent=5 // pred_check_branch
        %388 = sbr.rel (%p386) target = $region40
      $region39: #{tpu_custom_call.1} parent=5 // pred_region
        %s389 = ssub.s32 %s12, 2
        // Predicated region
        $region41: #{tpu_custom_call.1} parent=39 // pred_check
          %p390 = pneg %p109
        $region42: #{tpu_custom_call.1} parent=39 // pred_check_branch
          %392 = sbr.rel (%p390) target = $region44
        $region43: #{tpu_custom_call.1} parent=39 // pred_region
          %s393 = sand.u32 %s94, 1
          %s394 = scalar_lea.sflag [#allocation3], %s393
          %s395 = sand.u32 %s94, 1
          %s396 = smul.addr %s395, 16
          %s397 = scalar_lea.vmem [#allocation2], %s396
          %398 = dma.done %s394, 256
        $region44: #{tpu_custom_call.1} parent=39 // pred_fallthru
          _
      $region40: #{tpu_custom_call.1} parent=5 // pred_fallthru
        _
    $region6: #{tpu_custom_call.1} parent=1 // loop_footer
      %s16 = sadd.s32 1, %s12
    $region7: #{tpu_custom_call.1} parent=1 // loop_footer_branch
      %11 = sbr.rel target = $region3
    $region8: #{tpu_custom_call.1} parent=1 // loop_exit
      _
    %399 = vsyncpa [#allocation3], 1
    %s400 = scalar_lea.sflag [#allocation3], 1
    %401 = vsyncpa %s400, 1

</llo_original>
